<compile_context>
chip_gen: v7x
topology: tpu7x:2x2x1
jax: 0.10.0
libtpu: 0.0.40
codegen_flags: <defaults>
</compile_context>

<pallas_src>
import jax
import jax.numpy as jnp
import numpy as np
from jax.experimental import pallas as pl
from jax.experimental.pallas import tpu as pltpu

# Synthetic cfg.TRANS_HEAD.MLP_HEAD_DIM
MLP_HEAD_DIM = 32

_SUBLANE = 8


def _round_up(x, m):
    return (x + m - 1) // m * m


def _mlp2_kernel(x_ref, w1_ref, b1_ref, w2_ref, b2_ref, o_ref):
    """o = relu(relu(x @ w1 + b1) @ w2 + b2); all operands are VMEM tiles.

    Dots run on the MXU with f32 accumulation; biases are kept f32 and added
    post-accumulation; relus operate on the f32 accumulators.  Any activation
    dtype cast happens here (free VPU op), not as a separate XLA convert.
    """
    x = x_ref[...].astype(w1_ref.dtype)
    h = jnp.dot(x, w1_ref[...], preferred_element_type=jnp.float32) + b1_ref[...]
    h = jnp.maximum(h, 0.0)
    y = jnp.dot(h.astype(w2_ref.dtype), w2_ref[...],
                preferred_element_type=jnp.float32) + b2_ref[...]
    o_ref[...] = jnp.maximum(y, 0.0).astype(o_ref.dtype)


def init_params(key, dim_in, hidden_dim=MLP_HEAD_DIM):
    """PyTorch-convention params: fc{1,2}.weight (out,in), fc{1,2}.bias (out,)."""
    k1, k2 = jax.random.split(key)

    def xavier(k, shape):            # XavierFill == Glorot uniform
        fan_out, fan_in = shape
        limit = np.sqrt(6.0 / (fan_in + fan_out))
        return jax.random.uniform(k, shape, minval=-limit, maxval=limit,
                                  dtype=jnp.float32)

    return {
        "fc1_w": xavier(k1, (hidden_dim, dim_in)),
        "fc1_b": jnp.zeros((hidden_dim,), jnp.float32),
        "fc2_w": xavier(k2, (hidden_dim, hidden_dim)),
        "fc2_b": jnp.zeros((hidden_dim,), jnp.float32),
    }


def prepare_kernel_params(params, compute_dtype=jnp.bfloat16):
    """One-time weight preprocessing, hoisted out of the per-call hot path.

    - transpose weights to [in, out] so the kernel does plain row-major dots,
    - cast weights to `compute_dtype` (default bf16 → native MXU path),
    - biases stay f32 and are added post-accumulation (they are tiny).
    """
    w1_t = params["fc1_w"].T.astype(compute_dtype)             # (Din, H)
    b1 = params["fc1_b"].reshape(1, -1).astype(jnp.float32)    # (1, H)
    w2_t = params["fc2_w"].T.astype(compute_dtype)             # (H, H)
    b2 = params["fc2_b"].reshape(1, -1).astype(jnp.float32)    # (1, H)
    return {"w1_t": w1_t, "b1": b1, "w2_t": w2_t, "b2": b2,
            "hidden": int(params["fc2_w"].shape[0])}


def bbox_2mlp_head_forward(x, kparams, *, block_batch=1024):
    """Forward pass of bbox_2mlp_head using prepared (pre-transposed) params.

    Pass x in its native dtype (bf16 recommended) — no wrapper-side cast is
    performed; the output dtype matches the input dtype.
    """
    batch = x.shape[0]
    x2d = x.reshape(batch, -1)          # view; keep native dtype (no extra convert op)
    din = x2d.shape[1]
    hidden = kparams["hidden"]
    out_dtype = x2d.dtype

    w1_t, b1 = kparams["w1_t"], kparams["b1"]
    w2_t, b2 = kparams["w2_t"], kparams["b2"]

    # Batch tile: multiple of 8 sublanes, at most 1024 rows (amortizes the
    # ~0.35us per-step overhead), and at most ceil(B/2) so large batches yield
    # >= 2 grid steps for v7x's two TensorCores ("parallel" batch axis).
    tb = min(block_batch, _round_up(pl.cdiv(batch, 2), _SUBLANE))
    grid_steps = pl.cdiv(batch, tb)

    def nbytes(a):
        return a.size * jnp.dtype(a.dtype).itemsize

    flops = 2 * batch * (din * hidden + hidden * hidden)
    bytes_accessed = (nbytes(x2d) + nbytes(w1_t) + nbytes(b1) + nbytes(w2_t)
                      + nbytes(b2) + batch * hidden * jnp.dtype(out_dtype).itemsize)

    # Deeper buffering only pays when there are many grid steps; sweep 2 vs 3.
    stream_kw = dict(pipeline_mode=pl.Buffered(3)) if grid_steps >= 4 else {}
    x_spec = pl.BlockSpec((tb, din), lambda i: (i, 0), **stream_kw)
    o_spec = pl.BlockSpec((tb, hidden), lambda i: (i, 0), **stream_kw)

    out = pl.pallas_call(
        _mlp2_kernel,
        out_shape=jax.ShapeDtypeStruct((batch, hidden), out_dtype),
        grid_spec=pltpu.PrefetchScalarGridSpec(
            num_scalar_prefetch=0,
            grid=(grid_steps,),
            in_specs=[
                x_spec,                                            # activations
                pl.BlockSpec((din, hidden), lambda i: (0, 0)),     # W1^T (VMEM-resident)
                pl.BlockSpec((1, hidden), lambda i: (0, 0)),       # b1 (f32)
                pl.BlockSpec((hidden, hidden), lambda i: (0, 0)),  # W2^T (VMEM-resident)
                pl.BlockSpec((1, hidden), lambda i: (0, 0)),       # b2 (f32)
            ],
            out_specs=o_spec,
        ),
        compiler_params=pltpu.CompilerParams(
            dimension_semantics=("parallel",)),
        cost_estimate=pl.CostEstimate(
            flops=flops, transcendentals=0, bytes_accessed=bytes_accessed),
    )(x2d, w1_t, b1, w2_t, b2)
    return out


def reference_forward(x, params):
    b = x.shape[0]
    x2d = x.reshape(b, -1)
    h = jax.nn.relu(x2d @ params["fc1_w"].T + params["fc1_b"])
    return jax.nn.relu(h @ params["fc2_w"].T + params["fc2_b"])


if __name__ == "__main__":
    key = jax.random.PRNGKey(0)
    k_p, k_x1, k_x2 = jax.random.split(key, 3)

    # Small pooled-feature-like input: (B, C, S, S) -> view(B, -1) gives Din=64
    batch, c, s = 8, 4, 4
    dim_in = c * s * s

    params = init_params(k_p, dim_in)

    # ---- f32 path (exact semantics check) -------------------------------
    kparams_f32 = prepare_kernel_params(params, compute_dtype=jnp.float32)
    x_f32 = jax.random.normal(k_x1, (batch, c, s, s), dtype=jnp.float32)
    out_f32 = jax.block_until_ready(bbox_2mlp_head_forward(x_f32, kparams_f32))
    ref_f32 = reference_forward(x_f32, params)
    np.testing.assert_allclose(np.asarray(out_f32), np.asarray(ref_f32),
                               rtol=1e-5, atol=1e-5)

    # ---- bf16 fast path (native-dtype activations, f32 accumulation) ----
    kparams_bf16 = prepare_kernel_params(params, compute_dtype=jnp.bfloat16)
    x_bf16 = jax.random.normal(k_x2, (batch, c, s, s), dtype=jnp.bfloat16)
    out_bf16 = jax.block_until_ready(bbox_2mlp_head_forward(x_bf16, kparams_bf16))
    assert out_bf16.dtype == jnp.bfloat16
    ref_bf16 = reference_forward(x_bf16.astype(jnp.float32), params)
    np.testing.assert_allclose(np.asarray(out_bf16.astype(jnp.float32)),
                               np.asarray(ref_bf16), rtol=3e-2, atol=3e-2)

    print("KERNEL_OK")
</pallas_src>

<mosaic_0001>
module attributes {stable_mosaic.version = 11 : i64} {
  func.func @_mlp2_kernel(%arg0: i32, %arg1: memref<8x64xf32, #tpu.memory_space<vmem>>, %arg2: memref<64x32xf32, #tpu.memory_space<vmem>>, %arg3: memref<1x32xf32, #tpu.memory_space<vmem>>, %arg4: memref<32x32xf32, #tpu.memory_space<vmem>>, %arg5: memref<1x32xf32, #tpu.memory_space<vmem>>, %arg6: memref<8x32xf32, #tpu.memory_space<vmem>>) attributes {dimension_semantics = [#tpu.dimension_semantics<parallel>], iteration_bounds = array<i64: 1>, scalar_prefetch = 0 : i64, scratch_operands = 0 : i64, tpu.core_type = #tpu.core_type<tc>, window_params = [{transform_indices = @transform_0, window_bounds = array<i64: 8, 64>}, {pipeline_mode = #tpu.pipeline_mode<synchronous>, transform_indices = @transform_1, window_bounds = array<i64: 64, 32>}, {pipeline_mode = #tpu.pipeline_mode<synchronous>, transform_indices = @transform_2, window_bounds = array<i64: 1, 32>}, {pipeline_mode = #tpu.pipeline_mode<synchronous>, transform_indices = @transform_3, window_bounds = array<i64: 32, 32>}, {pipeline_mode = #tpu.pipeline_mode<synchronous>, transform_indices = @transform_4, window_bounds = array<i64: 1, 32>}, {transform_indices = @transform_5, window_bounds = array<i64: 8, 32>}]} {
    %c0 = arith.constant 0 : index
    %c0_0 = arith.constant 0 : index
    %0 = vector.load %arg1[%c0, %c0_0] : memref<8x64xf32, #tpu.memory_space<vmem>>, vector<8x64xf32>
    %c0_1 = arith.constant 0 : index
    %c0_2 = arith.constant 0 : index
    %1 = vector.load %arg2[%c0_1, %c0_2] : memref<64x32xf32, #tpu.memory_space<vmem>>, vector<64x32xf32>
    %cst = arith.constant dense<0.000000e+00> : vector<8x32xf32>
    %2 = tpu.matmul %0, %1, %cst {dimension_numbers = #tpu.dot_dimension_numbers<[1], [0], [0], [1], [0, 0, 1, 1], [], []>} : vector<8x64xf32>, vector<64x32xf32>, vector<8x32xf32> -> vector<8x32xf32>
    %c0_3 = arith.constant 0 : index
    %c0_4 = arith.constant 0 : index
    %3 = vector.load %arg3[%c0_3, %c0_4] : memref<1x32xf32, #tpu.memory_space<vmem>>, vector<1x32xf32>
    %4 = vector.broadcast %3 : vector<1x32xf32> to vector<8x32xf32>
    %5 = arith.addf %2, %4 : vector<8x32xf32>
    %cst_5 = arith.constant 0.000000e+00 : f32
    %6 = vector.broadcast %cst_5 : f32 to vector<8x32xf32>
    %7 = arith.maximumf %5, %6 : vector<8x32xf32>
    %c0_6 = arith.constant 0 : index
    %c0_7 = arith.constant 0 : index
    %8 = vector.load %arg4[%c0_6, %c0_7] : memref<32x32xf32, #tpu.memory_space<vmem>>, vector<32x32xf32>
    %cst_8 = arith.constant dense<0.000000e+00> : vector<8x32xf32>
    %9 = tpu.matmul %7, %8, %cst_8 {dimension_numbers = #tpu.dot_dimension_numbers<[1], [0], [0], [1], [0, 0, 1, 1], [], []>} : vector<8x32xf32>, vector<32x32xf32>, vector<8x32xf32> -> vector<8x32xf32>
    %c0_9 = arith.constant 0 : index
    %c0_10 = arith.constant 0 : index
    %10 = vector.load %arg5[%c0_9, %c0_10] : memref<1x32xf32, #tpu.memory_space<vmem>>, vector<1x32xf32>
    %11 = vector.broadcast %10 : vector<1x32xf32> to vector<8x32xf32>
    %12 = arith.addf %9, %11 : vector<8x32xf32>
    %cst_11 = arith.constant 0.000000e+00 : f32
    %13 = vector.broadcast %cst_11 : f32 to vector<8x32xf32>
    %14 = arith.maximumf %12, %13 : vector<8x32xf32>
    %c0_12 = arith.constant 0 : index
    %c0_13 = arith.constant 0 : index
    %15 = vector.load %arg6[%c0_12, %c0_13] : memref<8x32xf32, #tpu.memory_space<vmem>>, vector<8x32xf32>
    tpu.vector_store %arg6[%c0_12, %c0_13], %14 {strides = array<i32>} : memref<8x32xf32, #tpu.memory_space<vmem>>, vector<8x32xf32>,
    return
  }
  func.func @transform_0(%arg0: i32) -> (i32, i32) {
    %c0_i32 = arith.constant 0 : i32
    %c0_i32_0 = arith.constant 0 : i32
    return %arg0, %c0_i32 : i32, i32
  }
  func.func @transform_1(%arg0: i32) -> (i32, i32) {
    %c0_i32 = arith.constant 0 : i32
    %c0_i32_0 = arith.constant 0 : i32
    %c0_i32_1 = arith.constant 0 : i32
    return %c0_i32, %c0_i32_0 : i32, i32
  }
  func.func @transform_2(%arg0: i32) -> (i32, i32) {
    %c0_i32 = arith.constant 0 : i32
    %c0_i32_0 = arith.constant 0 : i32
    %c0_i32_1 = arith.constant 0 : i32
    return %c0_i32, %c0_i32_0 : i32, i32
  }
  func.func @transform_3(%arg0: i32) -> (i32, i32) {
    %c0_i32 = arith.constant 0 : i32
    %c0_i32_0 = arith.constant 0 : i32
    %c0_i32_1 = arith.constant 0 : i32
    return %c0_i32, %c0_i32_0 : i32, i32
  }
  func.func @transform_4(%arg0: i32) -> (i32, i32) {
    %c0_i32 = arith.constant 0 : i32
    %c0_i32_0 = arith.constant 0 : i32
    %c0_i32_1 = arith.constant 0 : i32
    return %c0_i32, %c0_i32_0 : i32, i32
  }
  func.func @transform_5(%arg0: i32) -> (i32, i32) {
    %c0_i32 = arith.constant 0 : i32
    %c0_i32_0 = arith.constant 0 : i32
    return %arg0, %c0_i32 : i32, i32
  }
}

</mosaic_0001>

<llo_original>
// kernel: tpu_custom_call.1
$region0: #{tpu_custom_call.1}
  #allocation0 [shape = 'u32[]', space=smem, size = 0x4, offset = 0x4, fixed_abs, tag = 'smem constant byte address 0x4 - core index']
  #allocation1 [shape = 'u32[144,128]{1,0:T(1,128)}', space=vmem, size = 0x12000, scoped, tag = 'internal scratch']
  %s0 = inlined_call_operand.vmem [shape: f32[8,64], index: 0, kind: input, shape index: {}]
  %s1 = inlined_call_operand.vmem [shape: f32[64,32], index: 1, kind: input, shape index: {}]
  %s2 = inlined_call_operand.vmem [shape: f32[1,32], index: 2, kind: input, shape index: {}]
  %s3 = inlined_call_operand.vmem [shape: f32[32,32], index: 3, kind: input, shape index: {}]
  %s4 = inlined_call_operand.vmem [shape: f32[1,32], index: 4, kind: input, shape index: {}]
  %s5 = inlined_call_operand.hbm [shape: f32[8,32], index: 5, kind: output, shape index: {}]
  %s6 = sld [smem:[#allocation0]]
  $region30: #{tpu_custom_call.1} parent=0
    _
  %s8 = ssub.s32 1, %s6
  %s9 = scalar_select 0, %s8, %s6
  $region1: #{tpu_custom_call.1} parent=0
    #allocation2 [shape = 'u8[4096]{0}', space=vmem, size = 0x1000, scoped, tag = 'output window, operand 0, single buffered']
    #allocation3 [shape = 's32[1]{0}', space=sflag, size = 0x4, scoped, tag = 'scoped memory for tpu_custom_call.1']
    %10 = vsyncpa [#allocation3], 0
    // Predicated region
    $region2: #{tpu_custom_call.1} parent=1 // pred_check
      _
    $region3: #{tpu_custom_call.1} parent=1 // pred_check_branch
      %12 = sbr.rel (0) target = $region5
    $region4: #{tpu_custom_call.1} parent=1 // pred_region
      _
    $region5: #{tpu_custom_call.1} parent=1 // pred_fallthru
      _
    // Predicated region
    $region6: #{tpu_custom_call.1} parent=1 // pred_check
      _
    $region7: #{tpu_custom_call.1} parent=1 // pred_check_branch
      %14 = sbr.rel (0) target = $region9
    $region8: #{tpu_custom_call.1} parent=1 // pred_region
      _
    $region9: #{tpu_custom_call.1} parent=1 // pred_fallthru
      _
    // Predicated region
    $region10: #{tpu_custom_call.1} parent=1 // pred_check
      _
    $region11: #{tpu_custom_call.1} parent=1 // pred_check_branch
      %16 = sbr.rel (0) target = $region13
    $region12: #{tpu_custom_call.1} parent=1 // pred_region
      _
    $region13: #{tpu_custom_call.1} parent=1 // pred_fallthru
      _
    // Predicated region
    $region14: #{tpu_custom_call.1} parent=1 // pred_check
      _
    $region15: #{tpu_custom_call.1} parent=1 // pred_check_branch
      %18 = sbr.rel (0) target = $region17
    $region16: #{tpu_custom_call.1} parent=1 // pred_region
      _
    $region17: #{tpu_custom_call.1} parent=1 // pred_fallthru
      _
    // Predicated region
    $region18: #{tpu_custom_call.1} parent=1 // pred_check
      _
    $region19: #{tpu_custom_call.1} parent=1 // pred_check_branch
      %20 = sbr.rel (0) target = $region21
    $region20: #{tpu_custom_call.1} parent=1 // pred_region
      _
    $region21: #{tpu_custom_call.1} parent=1 // pred_fallthru
      _
    %v21 = vld [vmem:[%s0] sm:$0xff]
    %v22 = vld [vmem:[%s1] sm:$0xff]
    %v23 = vld [vmem:[%s1 + $0x8] sm:$0xff]
    %v24 = vld [vmem:[%s1 + $0x10] sm:$0xff]
    %v25 = vld [vmem:[%s1 + $0x18] sm:$0xff]
    %v26 = vld [vmem:[%s1 + $0x20] sm:$0xff]
    %v27 = vld [vmem:[%s1 + $0x28] sm:$0xff]
    %v28 = vld [vmem:[%s1 + $0x30] sm:$0xff]
    %v29 = vld [vmem:[%s1 + $0x38] sm:$0xff]
    %v30 = vld [vmem:[%s2] sm:$0x1]
    %v32 = vlaneseq
    %v33 = vshrl.u32 %v32, 7
    %v34 = vsub.s32 0, %v33
    %v35 = vrot.slane %v30, %v34
    %vm37 = vcmask 523264
    %v39 = vsel %vm37, %v21, 0
    %41 = vmatprep.subr.mxu0 0.0
    %42 = vmatpush1.msra.mxu0 %v22
    %43 = vmatprep.subr.mxu0 0.0
    %44 = vmatpush1.msra.mxu0 %v23
    %45 = vmatprep.subr.mxu0 0.0
    %46 = vmatpush1.msra.mxu0 %v24
    %47 = vmatprep.subr.mxu0 0.0
    %48 = vmatpush1.msra.mxu0 %v25
    %49 = vmatprep.subr.mxu0 0.0
    %50 = vmatpush1.msra.mxu0 %v26
    %51 = vmatprep.subr.mxu0 0.0
    %52 = vmatpush1.msra.mxu0 %v27
    %53 = vmatprep.subr.mxu0 0.0
    %54 = vmatpush1.msra.mxu0 %v28
    %55 = vmatprep.subr.mxu0 0.0
    %56 = vmatpush1.msra.mxu0 %v29
    %57 = vmatprep.subr.mxu0 0.0
    %58 = vmatpush1.msra.mxu0 0.0
    %59 = vmatprep.subr.mxu0 0.0
    %60 = vmatpush1.msra.mxu0 0.0
    %61 = vmatprep.subr.mxu0 0.0
    %62 = vmatpush1.msra.mxu0 0.0
    %63 = vmatprep.subr.mxu0 0.0
    %64 = vmatpush1.msra.mxu0 0.0
    %65 = vmatprep.subr.mxu0 0.0
    %66 = vmatpush1.msra.mxu0 0.0
    %67 = vmatprep.subr.mxu0 0.0
    %68 = vmatpush1.msra.mxu0 0.0
    %69 = vmatprep.subr.mxu0 0.0
    %70 = vmatpush1.msra.mxu0 0.0
    %71 = vmatprep.subr.mxu0 0.0
    %72 = vmatpush1.msra.mxu0 0.0
    %73 = vmatprep.subr.mxu0 0.0
    %74 = vmatpush1.msra.mxu0 0.0
    %75 = vmatprep.subr.mxu0 0.0
    %76 = vmatpush1.msra.mxu0 0.0
    %77 = vmatprep.subr.mxu0 0.0
    %78 = vmatpush1.msra.mxu0 0.0
    %79 = vmatprep.subr.mxu0 0.0
    %80 = vmatpush1.msra.mxu0 0.0
    %81 = vmatprep.subr.mxu0 0.0
    %82 = vmatpush1.msra.mxu0 0.0
    %83 = vmatprep.subr.mxu0 0.0
    %84 = vmatpush1.msra.mxu0 0.0
    %85 = vmatprep.subr.mxu0 0.0
    %86 = vmatpush1.msra.mxu0 0.0
    %87 = vmatprep.subr.mxu0 0.0
    %88 = vmatpush1.msra.mxu0 0.0
    %89 = vmatprep.subr.mxu0 0.0
    %90 = vmatpush1.msra.mxu0 0.0
    %91 = vmatprep.subr.mxu0 0.0
    %92 = vmatpush1.msra.mxu0 0.0
    %93 = vmatprep.subr.mxu0 0.0
    %94 = vmatpush1.msra.mxu0 0.0
    %95 = vmatprep.subr.mxu0 0.0
    %96 = vmatpush1.msra.mxu0 0.0
    %97 = vmatprep.subr.mxu0 0.0
    %98 = vmatpush1.msra.mxu0 0.0
    %99 = vmatprep.subr.mxu0 0.0
    %100 = vmatpush1.msra.mxu0 0.0
    %101 = vmatprep.subr.mxu0 0.0
    %102 = vmatpush1.msra.mxu0 0.0
    %103 = vmatprep.subr.mxu0 0.0
    %104 = vmatpush1.msra.mxu0 0.0
    %105 = vmatprep.mubr.f32.mxu0 0.0
    %106 = vmatmul.mubr.f32.gmra.mrb[0].mxu0 %v39
    %v107 = vpop.f32.mrb[0].mxu0
    %v108 = vadd.f32 %v35, %v107
    %v109 = vpop.f32.mrb[0].mxu0
    %110 = vdwg.mxu0
    %v111 = vmax.f32 %v108, 0.0
    %v112 = vld [vmem:[%s3] sm:$0xff]
    %v113 = vld [vmem:[%s3 + $0x8] sm:$0xff]
    %v114 = vld [vmem:[%s3 + $0x10] sm:$0xff]
    %v115 = vld [vmem:[%s3 + $0x18] sm:$0xff]
    %v116 = vld [vmem:[%s4] sm:$0x1]
    %v118 = vlaneseq
    %v119 = vshrl.u32 %v118, 7
    %v120 = vsub.s32 0, %v119
    %v121 = vrot.slane %v116, %v120
    %vm123 = vcmask 261120
    %v125 = vsel %vm123, %v111, 0
    %127 = vmatprep.subr.mxu0 0.0
    %128 = vmatpush1.msra.mxu0 %v112
    %129 = vmatprep.subr.mxu0 0.0
    %130 = vmatpush1.msra.mxu0 %v113
    %131 = vmatprep.subr.mxu0 0.0
    %132 = vmatpush1.msra.mxu0 %v114
    %133 = vmatprep.subr.mxu0 0.0
    %134 = vmatpush1.msra.mxu0 %v115
    %135 = vmatprep.subr.mxu0 0.0
    %136 = vmatpush1.msra.mxu0 0.0
    %137 = vmatprep.subr.mxu0 0.0
    %138 = vmatpush1.msra.mxu0 0.0
    %139 = vmatprep.subr.mxu0 0.0
    %140 = vmatpush1.msra.mxu0 0.0
    %141 = vmatprep.subr.mxu0 0.0
    %142 = vmatpush1.msra.mxu0 0.0
    %143 = vmatprep.subr.mxu0 0.0
    %144 = vmatpush1.msra.mxu0 0.0
    %145 = vmatprep.subr.mxu0 0.0
    %146 = vmatpush1.msra.mxu0 0.0
    %147 = vmatprep.subr.mxu0 0.0
    %148 = vmatpush1.msra.mxu0 0.0
    %149 = vmatprep.subr.mxu0 0.0
    %150 = vmatpush1.msra.mxu0 0.0
    %151 = vmatprep.subr.mxu0 0.0
    %152 = vmatpush1.msra.mxu0 0.0
    %153 = vmatprep.subr.mxu0 0.0
    %154 = vmatpush1.msra.mxu0 0.0
    %155 = vmatprep.subr.mxu0 0.0
    %156 = vmatpush1.msra.mxu0 0.0
    %157 = vmatprep.subr.mxu0 0.0
    %158 = vmatpush1.msra.mxu0 0.0
    %159 = vmatprep.subr.mxu0 0.0
    %160 = vmatpush1.msra.mxu0 0.0
    %161 = vmatprep.subr.mxu0 0.0
    %162 = vmatpush1.msra.mxu0 0.0
    %163 = vmatprep.subr.mxu0 0.0
    %164 = vmatpush1.msra.mxu0 0.0
    %165 = vmatprep.subr.mxu0 0.0
    %166 = vmatpush1.msra.mxu0 0.0
    %167 = vmatprep.subr.mxu0 0.0
    %168 = vmatpush1.msra.mxu0 0.0
    %169 = vmatprep.subr.mxu0 0.0
    %170 = vmatpush1.msra.mxu0 0.0
    %171 = vmatprep.subr.mxu0 0.0
    %172 = vmatpush1.msra.mxu0 0.0
    %173 = vmatprep.subr.mxu0 0.0
    %174 = vmatpush1.msra.mxu0 0.0
    %175 = vmatprep.subr.mxu0 0.0
    %176 = vmatpush1.msra.mxu0 0.0
    %177 = vmatprep.subr.mxu0 0.0
    %178 = vmatpush1.msra.mxu0 0.0
    %179 = vmatprep.subr.mxu0 0.0
    %180 = vmatpush1.msra.mxu0 0.0
    %181 = vmatprep.subr.mxu0 0.0
    %182 = vmatpush1.msra.mxu0 0.0
    %183 = vmatprep.subr.mxu0 0.0
    %184 = vmatpush1.msra.mxu0 0.0
    %185 = vmatprep.subr.mxu0 0.0
    %186 = vmatpush1.msra.mxu0 0.0
    %187 = vmatprep.subr.mxu0 0.0
    %188 = vmatpush1.msra.mxu0 0.0
    %189 = vmatprep.subr.mxu0 0.0
    %190 = vmatpush1.msra.mxu0 0.0
    %191 = vmatprep.mubr.f32.mxu0 0.0
    %192 = vmatmul.mubr.f32.gmra.mrb[0].mxu0 %v125
    %v193 = vpop.f32.mrb[0].mxu0
    %v194 = vadd.f32 %v121, %v193
    %v195 = vpop.f32.mrb[0].mxu0
    %196 = vdwg.mxu0
    %v197 = vmax.f32 %v194, 0.0
    %198 = vst.msk [vmem:[#allocation2] sm:$0xff] %vm123, %v197
    // Predicated region
    $region22: #{tpu_custom_call.1} parent=1 // pred_check
      _
    $region23: #{tpu_custom_call.1} parent=1 // pred_check_branch
      %200 = sbr.rel (0) target = $region25
    $region24: #{tpu_custom_call.1} parent=1 // pred_region
      %s202 = ssub.s32 128, 128
      %203 = vsyncadd [#allocation3], %s202
      %s205 = sshll.u32 [#allocation2], 4
      %s206 = int_to_ptr.vmem [resolvable:$true] %s205
      %208 = dma.vmem_to_hbm [thread:$0]  %s206, 128, %s5, [#allocation3]
    $region25: #{tpu_custom_call.1} parent=1 // pred_fallthru
      _
    // Predicated region
    $region26: #{tpu_custom_call.1} parent=1 // pred_check
      _
    $region27: #{tpu_custom_call.1} parent=1 // pred_check_branch
      %210 = sbr.rel (0) target = $region29
    $region28: #{tpu_custom_call.1} parent=1 // pred_region
      %211 = dma.done [#allocation3], 128
    $region29: #{tpu_custom_call.1} parent=1 // pred_fallthru
      _
    %212 = vsyncpa [#allocation3], 1

</llo_original>
